<compile_context>
chip_gen: v7x
topology: tpu7x:2x2x1
jax: 0.10.0
libtpu: 0.0.40
codegen_flags: <defaults>
</compile_context>

<pallas_src>
import jax
import jax.numpy as jnp
from jax import lax
from jax.experimental import pallas as pl
from jax.experimental.pallas import tpu as pltpu

_LANE = 128
_SUBLANE = 8
_LANE_WIDTHS = (4096, 2048, 1024, 512, 256, 128)   # widest first

_TUNING_CACHE = None


def _tpu_tuning():
    """Per-generation (target_block_bytes, vmem_limit_cap_bytes)."""
    global _TUNING_CACHE
    if _TUNING_CACHE is not None:
        return _TUNING_CACHE
    vmem_cap = None
    try:
        vmem_cap = int(pltpu.get_tpu_info().vmem_capacity_bytes)
    except Exception:
        vmem_cap = None
    if vmem_cap is not None and vmem_cap >= (100 << 20):
        # v5e / v6e: 128 MiB physical VMEM -> 16 MiB blocks, up to 80 MiB scoped.
        _TUNING_CACHE = (16 << 20, 80 << 20)
    else:
        # v7x (64 MiB physical VMEM) or unknown generation: stay conservative.
        _TUNING_CACHE = (8 << 20, 52 << 20)
    return _TUNING_CACHE


def _copy_kernel(x_ref, o_ref):
    # Identity copy of the current (block_rows, cols) tile.
    o_ref[...] = x_ref[...]


def _pallas_copy_slab(slab: jnp.ndarray, sublane_tile: int) -> jnp.ndarray:
    """Copy a lane-dense 2-D slab (cols % 128 == 0) through a Pallas kernel."""
    rows, cols = slab.shape
    itemsize = jnp.dtype(slab.dtype).itemsize
    row_bytes = cols * itemsize
    total_bytes = rows * row_bytes
    target_block_bytes, vmem_cap_limit = _tpu_tuning()

    if rows <= sublane_tile:
        # Tiny slab: one full-extent block (allowed: block dim == array dim).
        block_rows = rows
    else:
        tile_bytes = sublane_tile * row_bytes
        # Cap the block so large slabs yield >= ~8 grid steps (lets v7x shard
        # the stream across its 2 TensorCores), but never below one native
        # sublane-tile row group.
        eff_target = min(target_block_bytes, max(total_bytes // 8, tile_bytes))
        target_rows = max(sublane_tile, eff_target // row_bytes)
        block_rows = (target_rows // sublane_tile) * sublane_tile
        block_rows = min(block_rows, (rows // sublane_tile) * sublane_tile)
        block_rows = max(block_rows, sublane_tile)

    # Ragged last block (rows % block_rows != 0) is clipped by Pallas: the
    # out-of-bounds part of the output block is dropped, and since the copy is
    # elementwise with matching in/out index maps, no garbage leaks in-bounds.
    grid = (pl.cdiv(rows, block_rows),)

    # 2 (in) + 2 (out) double-buffered blocks, plus headroom; capped per
    # generation so it is safe on v7x (64 MiB physical VMEM) and not
    # artificially tight on v5e/v6e (128 MiB).
    block_bytes = block_rows * row_bytes
    vmem_limit = int(min(vmem_cap_limit,
                         max(32 << 20, 4 * block_bytes + (12 << 20))))

    return pl.pallas_call(
        _copy_kernel,
        out_shape=jax.ShapeDtypeStruct((rows, cols), slab.dtype),
        grid_spec=pltpu.PrefetchScalarGridSpec(
            num_scalar_prefetch=0,
            grid=grid,
            in_specs=[pl.BlockSpec((block_rows, cols), lambda i: (i, 0))],
            out_specs=pl.BlockSpec((block_rows, cols), lambda i: (i, 0)),
        ),
        compiler_params=pltpu.CompilerParams(
            dimension_semantics=("parallel",),
            vmem_limit_bytes=vmem_limit,
        ),
    )(slab)


def _copy_ragged_stream(stream: jnp.ndarray, sublane_tile: int) -> jnp.ndarray:
    """Stream length not a multiple of 128: copy the multiple-of-128 prefix
    unpadded through the slab kernel; pad only the (<128-element) tail chunk."""
    m = stream.shape[0]
    prefix_len = (m // _LANE) * _LANE
    tail_len = m - prefix_len

    pieces = []
    if prefix_len > 0:
        pcols = _LANE
        for c in _LANE_WIDTHS:
            if prefix_len >= c and prefix_len % c == 0:
                pcols = c
                break
        prefix = stream[:prefix_len].reshape(prefix_len // pcols, pcols)
        pieces.append(_pallas_copy_slab(prefix, sublane_tile).reshape(-1))
    if tail_len > 0:
        tail = jnp.pad(stream[prefix_len:], (0, _LANE - tail_len))
        tail_out = _pallas_copy_slab(tail.reshape(1, _LANE), sublane_tile)
        pieces.append(tail_out.reshape(-1)[:tail_len])
    return pieces[0] if len(pieces) == 1 else jnp.concatenate(pieces)


def _pallas_identity_copy(flat: jnp.ndarray) -> jnp.ndarray:
    """Identity-copy a flat (1-D) element stream via the Pallas kernel."""
    dtype = flat.dtype
    n = flat.shape[0]
    itemsize = jnp.dtype(dtype).itemsize

    # (a) Pack sub-32-bit float/int dtypes into uint32 words (pure bitcast,
    #     no HBM traffic) so the copy always moves full 32-bit lanes.
    packable = (itemsize < 4 and n > 0 and (n * itemsize) % 4 == 0 and
                (jnp.issubdtype(dtype, jnp.floating) or
                 jnp.issubdtype(dtype, jnp.integer)))
    if packable:
        per_word = 4 // itemsize
        stream = lax.bitcast_convert_type(
            flat.reshape(n // per_word, per_word), jnp.uint32)
        sublane_tile = _SUBLANE
    else:
        stream = flat
        # Native packed sublane tile: 8 for 32-bit, 16 for bf16, 32 for int8/fp8.
        sublane_tile = _SUBLANE * max(1, 4 // itemsize)
    m = stream.shape[0]

    # (b) Fold the stream into the widest lane-dense slab needing no padding.
    cols = None
    for c in _LANE_WIDTHS:
        if m >= c and m % c == 0:
            cols = c
            break

    if cols is not None:
        out = _pallas_copy_slab(stream.reshape(m // cols, cols),
                                sublane_tile).reshape(-1)
    else:
        out = _copy_ragged_stream(stream, sublane_tile)

    # (c) Unpack back to the original dtype (pure bitcast).
    if packable:
        out = lax.bitcast_convert_type(out, dtype).reshape(-1)
    return out


def rehapse(x: jnp.ndarray, shape) -> jnp.ndarray:
    """Pallas-backed equivalent of Rehapse.forward(x, shape)."""
    if x.size == 0:
        return x.reshape(shape)          # nothing to copy
    flat = x.reshape(-1)                 # row-major linearization (metadata)
    copied = _pallas_identity_copy(flat)
    return copied.reshape(shape)         # target shape applied as metadata


class Rehapse:
    """Mirror of the PyTorch module (stateless; no parameters)."""

    def __init__(self, shape=None):
        self.shape = shape

    def __call__(self, x, shape=None):
        if shape is None:
            shape = self.shape
        return rehapse(x, shape)


if __name__ == "__main__":
    key = jax.random.PRNGKey(0)
    k1, k2, k3, k4, k5 = jax.random.split(key, 5)

    # 1) Typical NCHW -> (N, C, H*W) reshape, f32, lane-aligned main path.
    x = jax.random.normal(k1, (2, 4, 16, 16), dtype=jnp.float32)
    target_shape = (2, 4, 256)
    mod = Rehapse(shape=target_shape)
    y = jax.block_until_ready(mod(x))
    assert y.shape == tuple(target_shape) and y.dtype == x.dtype
    assert bool(jnp.all(y == x.reshape(target_shape)))

    # 2) Ragged row count in the slab (rows % block_rows != 0): confirms the
    #    clipped final block leaks no garbage into the output.
    x2 = jax.random.normal(k2, (9, 4096), dtype=jnp.float32)
    y2 = jax.block_until_ready(rehapse(x2, (36864,)))
    assert y2.shape == (36864,) and bool(jnp.all(y2 == x2.reshape(-1)))

    # 3) Ragged stream length (not a multiple of 128), f32.
    x3 = jax.random.normal(k3, (3, 5, 7), dtype=jnp.float32)
    y3 = jax.block_until_ready(rehapse(x3, (5, 21)))
    assert y3.shape == (5, 21) and bool(jnp.all(y3 == x3.reshape(5, 21)))

    # 4) bf16, even length: uint32-packed path.
    x4 = jax.random.normal(k4, (2, 4, 16, 16), dtype=jnp.bfloat16)
    y4 = jax.block_until_ready(rehapse(x4, (8, 256)))
    assert y4.dtype == jnp.bfloat16 and bool(jnp.all(y4 == x4.reshape(8, 256)))

    # 5) bf16, odd length: native-tile (unpacked) fallback path.
    x5 = jax.random.normal(k5, (105,), dtype=jnp.bfloat16)
    y5 = jax.block_until_ready(rehapse(x5, (5, 21)))
    assert y5.dtype == jnp.bfloat16 and bool(jnp.all(y5 == x5.reshape(5, 21)))

    print("KERNEL_OK")
</pallas_src>

<mosaic_0001>
module attributes {stable_mosaic.version = 11 : i64} {
  func.func @_copy_kernel(%arg0: i32, %arg1: memref<1x2048xf32, #tpu.memory_space<vmem>>, %arg2: memref<1x2048xf32, #tpu.memory_space<vmem>>) attributes {dimension_semantics = [#tpu.dimension_semantics<parallel>], iteration_bounds = array<i64: 1>, scalar_prefetch = 0 : i64, scratch_operands = 0 : i64, tpu.core_type = #tpu.core_type<tc>, window_params = [{transform_indices = @transform_0, window_bounds = array<i64: 1, 2048>}, {transform_indices = @transform_1, window_bounds = array<i64: 1, 2048>}]} {
    %c0 = arith.constant 0 : index
    %c0_0 = arith.constant 0 : index
    %0 = vector.load %arg1[%c0, %c0_0] : memref<1x2048xf32, #tpu.memory_space<vmem>>, vector<1x2048xf32>
    %c0_1 = arith.constant 0 : index
    %c0_2 = arith.constant 0 : index
    %1 = vector.load %arg2[%c0_1, %c0_2] : memref<1x2048xf32, #tpu.memory_space<vmem>>, vector<1x2048xf32>
    tpu.vector_store %arg2[%c0_1, %c0_2], %0 {strides = array<i32>} : memref<1x2048xf32, #tpu.memory_space<vmem>>, vector<1x2048xf32>,
    return
  }
  func.func @transform_0(%arg0: i32) -> (i32, i32) {
    %c0_i32 = arith.constant 0 : i32
    %c0_i32_0 = arith.constant 0 : i32
    return %arg0, %c0_i32 : i32, i32
  }
  func.func @transform_1(%arg0: i32) -> (i32, i32) {
    %c0_i32 = arith.constant 0 : i32
    %c0_i32_0 = arith.constant 0 : i32
    return %arg0, %c0_i32 : i32, i32
  }
}

</mosaic_0001>

<llo_original>
// kernel: tpu_custom_call.1
$region0: #{tpu_custom_call.1}
  #allocation0 [shape = 'u32[]', space=smem, size = 0x4, offset = 0x4, fixed_abs, tag = 'smem constant byte address 0x4 - core index']
  #allocation1 [shape = 'u32[144,128]{1,0:T(1,128)}', space=vmem, size = 0x12000, scoped, tag = 'internal scratch']
  %s0 = inlined_call_operand.hbm [shape: f32[1,2048], index: 0, kind: input, shape index: {}]
  %s1 = inlined_call_operand.hbm [shape: f32[1,2048], index: 1, kind: output, shape index: {}]
  %s2 = sld [smem:[#allocation0]]
  $region18: #{tpu_custom_call.1} parent=0
    _
  %s4 = ssub.s32 1, %s2
  %s5 = scalar_select 0, %s4, %s2
  $region1: #{tpu_custom_call.1} parent=0
    #allocation2 [shape = 'u8[8192]{0}', space=vmem, size = 0x2000, scoped, tag = 'input window, operand 0, single buffered']
    #allocation3 [shape = 's32[1]{0}', space=sflag, size = 0x4, scoped, tag = 'scoped memory for tpu_custom_call.1']
    #allocation4 [shape = 's32[1]{0}', space=sflag, size = 0x4, scoped, tag = 'scoped memory for tpu_custom_call.1']
    #allocation5 [shape = 'u8[8192]{0}', space=vmem, size = 0x2000, scoped, tag = 'output window, operand 0, single buffered']
    %6 = vsyncpa [#allocation3], 0
    %7 = vsyncpa [#allocation4], 0
    // Predicated region
    $region2: #{tpu_custom_call.1} parent=1 // pred_check
      _
    $region3: #{tpu_custom_call.1} parent=1 // pred_check_branch
      %9 = sbr.rel (0) target = $region5
    $region4: #{tpu_custom_call.1} parent=1 // pred_region
      %s11 = ssub.s32 256, 256
      %12 = vsyncadd [#allocation3], %s11
      %s14 = sshll.u32 [#allocation2], 4
      %s15 = int_to_ptr.vmem [resolvable:$true] %s14
      %17 = dma.hbm_to_vmem [thread:$0]  %s0, 256, %s15, [#allocation3]
    $region5: #{tpu_custom_call.1} parent=1 // pred_fallthru
      _
    // Predicated region
    $region6: #{tpu_custom_call.1} parent=1 // pred_check
      _
    $region7: #{tpu_custom_call.1} parent=1 // pred_check_branch
      %19 = sbr.rel (0) target = $region9
    $region8: #{tpu_custom_call.1} parent=1 // pred_region
      %20 = dma.done [#allocation3], 256
    $region9: #{tpu_custom_call.1} parent=1 // pred_fallthru
      _
    %v21 = vld [vmem:[#allocation2] sm:$0xff]
    %v22 = vld [vmem:[#allocation2 + $0x8] sm:$0xff]
    %23 = vst [vmem:[#allocation5] sm:$0xff] %v21
    %24 = vst [vmem:[#allocation5 + $0x8] sm:$0xff] %v22
    // Predicated region
    $region10: #{tpu_custom_call.1} parent=1 // pred_check
      _
    $region11: #{tpu_custom_call.1} parent=1 // pred_check_branch
      %26 = sbr.rel (0) target = $region13
    $region12: #{tpu_custom_call.1} parent=1 // pred_region
      %s28 = ssub.s32 256, 256
      %29 = vsyncadd [#allocation4], %s28
      %s31 = sshll.u32 [#allocation5], 4
      %s32 = int_to_ptr.vmem [resolvable:$true] %s31
      %34 = dma.vmem_to_hbm [thread:$0]  %s32, 256, %s1, [#allocation4]
    $region13: #{tpu_custom_call.1} parent=1 // pred_fallthru
      _
    // Predicated region
    $region14: #{tpu_custom_call.1} parent=1 // pred_check
      _
    $region15: #{tpu_custom_call.1} parent=1 // pred_check_branch
      %36 = sbr.rel (0) target = $region17
    $region16: #{tpu_custom_call.1} parent=1 // pred_region
      %37 = dma.done [#allocation4], 256
    $region17: #{tpu_custom_call.1} parent=1 // pred_fallthru
      _
    %38 = vsyncpa [#allocation3], 1
    %39 = vsyncpa [#allocation4], 1

</llo_original>
